<compile_context>
chip_gen: v5e
topology: v5e:2x2
jax: 0.10.0
libtpu: 0.0.40
codegen_flags: <defaults>
</compile_context>

<pallas_src>
import jax
import jax.numpy as jnp
from jax import lax
from jax.experimental import pallas as pl
from jax.experimental.pallas import tpu as pltpu


LAYER_DIMS = (16, 32, 64, 128)  # hidden widths of AsteroidModel


def _round_up(n, m):
    return ((n + m - 1) // m) * m


def _mlp_kernel(x_ref,
                w0_ref, b0_ref,
                w1_ref, b1_ref,
                w2_ref, b2_ref,
                w3_ref, b3_ref,
                w4_ref, b4_ref,
                o_ref):
    """Fused 5-layer MLP on one batch tile.

    x_ref : (batch_tile, in_size) f32   -- untransposed input block
    W_l   : (out_l, in_l)               -- PyTorch layout, layer0 f32, rest bf16
    b_l   : (out_l, 1) f32
    o_ref : (out_size, batch_tile) f32  -- batch on lanes (lane-dense store)
    """
    x = x_ref[...]
    # Layer 0 in f32: contract the feature axis of both operands so the result
    # is already (16, batch_tile) -> no wrapper-side transpose of the input.
    acc = lax.dot_general(w0_ref[...], x, (((1,), (1,)), ((), ())),
                          preferred_element_type=jnp.float32)
    h = jnp.maximum(acc + b0_ref[...], 0.0).astype(jnp.bfloat16)   # (16, bt)

    # Hidden layers: bf16 MXU operands, f32 accumulation, f32 bias/ReLU
    # (v5e-safe), cast to bf16 fused into the activation for the next matmul.
    for w_ref, b_ref in ((w1_ref, b1_ref), (w2_ref, b2_ref), (w3_ref, b3_ref)):
        acc = jnp.dot(w_ref[...], h, preferred_element_type=jnp.float32)
        h = jnp.maximum(acc + b_ref[...], 0.0).astype(jnp.bfloat16)

    # Output layer: no ReLU, f32 result.
    acc = jnp.dot(w4_ref[...], h, preferred_element_type=jnp.float32)
    o_ref[...] = (acc + b4_ref[...]).astype(o_ref.dtype)


def prepare_params(params):
    """PyTorch-layout (out, in) weights / (out,) biases -> kernel operands.

    Layer 0 weight stays f32 (preserves input precision), layers 1..4 are cast
    to bf16 once; biases become (out, 1) f32 so they broadcast over the lane
    (batch) axis inside the kernel. No padding needed: full-array BlockSpecs.
    """
    prepped = []
    for li, (w, b) in enumerate(params):
        w_dt = jnp.float32 if li == 0 else jnp.bfloat16
        prepped.append((jnp.asarray(w, w_dt),
                        jnp.asarray(b, jnp.float32).reshape(-1, 1)))
    return prepped


def _choose_tiling(batch, target_tile):
    """Pick (batch_tile, padded_batch).

    - tile is a multiple of 128 (lane width) and <= target_tile
    - padded_batch is the smallest tile-multiple covering batch (waste bounded
      by ~tile, never a fixed huge round-up)
    - when batch is big enough, force >=2 grid steps so v7x's two TensorCores
      both get work ("parallel" axis); the extra step costs ~0.35us on v5e/v6e.
    """
    assert target_tile % 128 == 0
    full = _round_up(max(batch, 1), 128)
    n_steps = max(pl.cdiv(full, target_tile), 2 if full > 256 else 1)
    tile = _round_up(pl.cdiv(full, n_steps), 128)
    return tile, n_steps * tile


def asteroid_model_forward(x, params, *, target_tile=4096):
    """Run the fused MLP kernel.

    x: (B, input_size) float32
    params: list of (W, b) with PyTorch layout W=(out, in), b=(out,)
    returns: (B, output_size) float32
    """
    B, in_size = x.shape
    out_size = params[-1][0].shape[0]

    prepped = prepare_params(params)
    batch_tile, b_pad = _choose_tiling(B, target_tile)

    # Only a cheap batch-dim zero-pad (no transpose, no feature pad); skipped
    # entirely when B already divides the tile. Padded columns are garbage that
    # flows through the layers and is sliced away before returning.
    x_p = x if b_pad == B else jnp.pad(x, ((0, b_pad - B), (0, 0)))

    in_specs = [pl.BlockSpec((batch_tile, in_size), lambda i: (i, 0))]
    flat = []
    for w, b in prepped:
        in_specs.append(pl.BlockSpec(w.shape, lambda i: (0, 0)))  # resident weight
        in_specs.append(pl.BlockSpec(b.shape, lambda i: (0, 0)))  # resident bias
        flat.extend([w, b])

    out_specs = pl.BlockSpec((out_size, batch_tile), lambda i: (0, i))
    grid = (b_pad // batch_tile,)

    out_t = pl.pallas_call(
        _mlp_kernel,
        out_shape=jax.ShapeDtypeStruct((out_size, b_pad), jnp.float32),
        grid_spec=pl.GridSpec(grid=grid, in_specs=in_specs, out_specs=out_specs),
        compiler_params=pltpu.CompilerParams(
            dimension_semantics=("parallel",),
            vmem_limit_bytes=32 * 1024 * 1024),
    )(x_p, *flat)

    # Strip batch padding; transpose the tiny (out_size, B) slab back to the
    # PyTorch-shaped (B, out_size).
    return out_t[:, :B].T


def init_params(key, input_size, output_size):
    """Deterministic init mimicking PyTorch Linear (uniform +/- 1/sqrt(fan_in))."""
    dims = [input_size] + list(LAYER_DIMS) + [output_size]
    params = []
    for li, (fan_in, fan_out) in enumerate(zip(dims[:-1], dims[1:])):
        kw, kb = jax.random.split(jax.random.fold_in(key, li))
        bound = 1.0 / jnp.sqrt(jnp.float32(fan_in))
        w = jax.random.uniform(kw, (fan_out, fan_in), jnp.float32, -bound, bound)
        b = jax.random.uniform(kb, (fan_out,), jnp.float32, -bound, bound)
        params.append((w, b))
    return params


def reference_forward(x, params):
    """Plain-JAX f32 reference matching the PyTorch forward semantics."""
    h = x
    for i, (w, b) in enumerate(params):
        h = h @ w.T + b
        if i < len(params) - 1:
            h = jnp.maximum(h, 0.0)
    return h


if __name__ == "__main__":
    input_size, hidden_size, output_size = 8, 32, 4  # hidden_size unused in forward
    key = jax.random.PRNGKey(0)
    kx, kp = jax.random.split(key)
    params = init_params(kp, input_size, output_size)

    # batch=8: single-tile padding path; batch=1030: multi-step "parallel" grid
    # (tile auto-chosen so the grid has 2 steps -> exercises megacore path).
    for batch in (8, 1030):
        x = jax.random.normal(jax.random.fold_in(kx, batch),
                              (batch, input_size), jnp.float32)
        out = jax.block_until_ready(asteroid_model_forward(x, params))
        ref = reference_forward(x, params)
        assert out.shape == (batch, output_size)
        # bf16 hidden-layer MXU operands (f32 accumulation, f32 layer 0) vs f32
        # reference -> relaxed tolerance.
        err = float(jnp.max(jnp.abs(out - ref)))
        assert jnp.allclose(out, ref, atol=5e-2, rtol=5e-2), err

    print("KERNEL_OK")
</pallas_src>

<mosaic_0001>
module attributes {stable_mosaic.version = 11 : i64} {
  func.func @_mlp_kernel(%arg0: i32, %arg1: memref<128x8xf32, #tpu.memory_space<vmem>>, %arg2: memref<16x8xf32, #tpu.memory_space<vmem>>, %arg3: memref<16x1xf32, #tpu.memory_space<vmem>>, %arg4: memref<32x16xbf16, #tpu.memory_space<vmem>>, %arg5: memref<32x1xf32, #tpu.memory_space<vmem>>, %arg6: memref<64x32xbf16, #tpu.memory_space<vmem>>, %arg7: memref<64x1xf32, #tpu.memory_space<vmem>>, %arg8: memref<128x64xbf16, #tpu.memory_space<vmem>>, %arg9: memref<128x1xf32, #tpu.memory_space<vmem>>, %arg10: memref<4x128xbf16, #tpu.memory_space<vmem>>, %arg11: memref<4x1xf32, #tpu.memory_space<vmem>>, %arg12: memref<4x128xf32, #tpu.memory_space<vmem>>) attributes {dimension_semantics = [#tpu.dimension_semantics<parallel>], iteration_bounds = array<i64: 1>, scalar_prefetch = 0 : i64, scratch_operands = 0 : i64, tpu.core_type = #tpu.core_type<tc>, window_params = [{transform_indices = @transform_0, window_bounds = array<i64: 128, 8>}, {pipeline_mode = #tpu.pipeline_mode<synchronous>, transform_indices = @transform_1, window_bounds = array<i64: 16, 8>}, {pipeline_mode = #tpu.pipeline_mode<synchronous>, transform_indices = @transform_2, window_bounds = array<i64: 16, 1>}, {pipeline_mode = #tpu.pipeline_mode<synchronous>, transform_indices = @transform_3, window_bounds = array<i64: 32, 16>}, {pipeline_mode = #tpu.pipeline_mode<synchronous>, transform_indices = @transform_4, window_bounds = array<i64: 32, 1>}, {pipeline_mode = #tpu.pipeline_mode<synchronous>, transform_indices = @transform_5, window_bounds = array<i64: 64, 32>}, {pipeline_mode = #tpu.pipeline_mode<synchronous>, transform_indices = @transform_6, window_bounds = array<i64: 64, 1>}, {pipeline_mode = #tpu.pipeline_mode<synchronous>, transform_indices = @transform_7, window_bounds = array<i64: 128, 64>}, {pipeline_mode = #tpu.pipeline_mode<synchronous>, transform_indices = @transform_8, window_bounds = array<i64: 128, 1>}, {pipeline_mode = #tpu.pipeline_mode<synchronous>, transform_indices = @transform_9, window_bounds = array<i64: 4, 128>}, {pipeline_mode = #tpu.pipeline_mode<synchronous>, transform_indices = @transform_10, window_bounds = array<i64: 4, 1>}, {transform_indices = @transform_11, window_bounds = array<i64: 4, 128>}]} {
    %c0 = arith.constant 0 : index
    %c0_0 = arith.constant 0 : index
    %0 = vector.load %arg1[%c0, %c0_0] : memref<128x8xf32, #tpu.memory_space<vmem>>, vector<128x8xf32>
    %c0_1 = arith.constant 0 : index
    %c0_2 = arith.constant 0 : index
    %1 = vector.load %arg2[%c0_1, %c0_2] : memref<16x8xf32, #tpu.memory_space<vmem>>, vector<16x8xf32>
    %cst = arith.constant dense<0.000000e+00> : vector<16x128xf32>
    %2 = tpu.matmul %1, %0, %cst {dimension_numbers = #tpu.dot_dimension_numbers<[1], [1], [0], [0], [0, 0, 1, 0], [], []>} : vector<16x8xf32>, vector<128x8xf32>, vector<16x128xf32> -> vector<16x128xf32>
    %c0_3 = arith.constant 0 : index
    %c0_4 = arith.constant 0 : index
    %3 = vector.load %arg3[%c0_3, %c0_4] : memref<16x1xf32, #tpu.memory_space<vmem>>, vector<16x1xf32>
    %4 = vector.broadcast %3 : vector<16x1xf32> to vector<16x128xf32>
    %5 = arith.addf %2, %4 : vector<16x128xf32>
    %cst_5 = arith.constant 0.000000e+00 : f32
    %6 = vector.broadcast %cst_5 : f32 to vector<16x128xf32>
    %7 = arith.maximumf %5, %6 : vector<16x128xf32>
    %8 = arith.truncf %7 : vector<16x128xf32> to vector<16x128xbf16>
    %c0_6 = arith.constant 0 : index
    %c0_7 = arith.constant 0 : index
    %9 = vector.load %arg4[%c0_6, %c0_7] : memref<32x16xbf16, #tpu.memory_space<vmem>>, vector<32x16xbf16>
    %cst_8 = arith.constant dense<0.000000e+00> : vector<32x128xf32>
    %10 = tpu.matmul %9, %8, %cst_8 {dimension_numbers = #tpu.dot_dimension_numbers<[1], [0], [0], [1], [0, 0, 1, 1], [], []>} : vector<32x16xbf16>, vector<16x128xbf16>, vector<32x128xf32> -> vector<32x128xf32>
    %c0_9 = arith.constant 0 : index
    %c0_10 = arith.constant 0 : index
    %11 = vector.load %arg5[%c0_9, %c0_10] : memref<32x1xf32, #tpu.memory_space<vmem>>, vector<32x1xf32>
    %12 = vector.broadcast %11 : vector<32x1xf32> to vector<32x128xf32>
    %13 = arith.addf %10, %12 : vector<32x128xf32>
    %cst_11 = arith.constant 0.000000e+00 : f32
    %14 = vector.broadcast %cst_11 : f32 to vector<32x128xf32>
    %15 = arith.maximumf %13, %14 : vector<32x128xf32>
    %16 = arith.truncf %15 : vector<32x128xf32> to vector<32x128xbf16>
    %c0_12 = arith.constant 0 : index
    %c0_13 = arith.constant 0 : index
    %17 = vector.load %arg6[%c0_12, %c0_13] : memref<64x32xbf16, #tpu.memory_space<vmem>>, vector<64x32xbf16>
    %cst_14 = arith.constant dense<0.000000e+00> : vector<64x128xf32>
    %18 = tpu.matmul %17, %16, %cst_14 {dimension_numbers = #tpu.dot_dimension_numbers<[1], [0], [0], [1], [0, 0, 1, 1], [], []>} : vector<64x32xbf16>, vector<32x128xbf16>, vector<64x128xf32> -> vector<64x128xf32>
    %c0_15 = arith.constant 0 : index
    %c0_16 = arith.constant 0 : index
    %19 = vector.load %arg7[%c0_15, %c0_16] : memref<64x1xf32, #tpu.memory_space<vmem>>, vector<64x1xf32>
    %20 = vector.broadcast %19 : vector<64x1xf32> to vector<64x128xf32>
    %21 = arith.addf %18, %20 : vector<64x128xf32>
    %cst_17 = arith.constant 0.000000e+00 : f32
    %22 = vector.broadcast %cst_17 : f32 to vector<64x128xf32>
    %23 = arith.maximumf %21, %22 : vector<64x128xf32>
    %24 = arith.truncf %23 : vector<64x128xf32> to vector<64x128xbf16>
    %c0_18 = arith.constant 0 : index
    %c0_19 = arith.constant 0 : index
    %25 = vector.load %arg8[%c0_18, %c0_19] : memref<128x64xbf16, #tpu.memory_space<vmem>>, vector<128x64xbf16>
    %cst_20 = arith.constant dense<0.000000e+00> : vector<128x128xf32>
    %26 = tpu.matmul %25, %24, %cst_20 {dimension_numbers = #tpu.dot_dimension_numbers<[1], [0], [0], [1], [0, 0, 1, 1], [], []>} : vector<128x64xbf16>, vector<64x128xbf16>, vector<128x128xf32> -> vector<128x128xf32>
    %c0_21 = arith.constant 0 : index
    %c0_22 = arith.constant 0 : index
    %27 = vector.load %arg9[%c0_21, %c0_22] : memref<128x1xf32, #tpu.memory_space<vmem>>, vector<128x1xf32>
    %28 = vector.broadcast %27 : vector<128x1xf32> to vector<128x128xf32>
    %29 = arith.addf %26, %28 : vector<128x128xf32>
    %cst_23 = arith.constant 0.000000e+00 : f32
    %30 = vector.broadcast %cst_23 : f32 to vector<128x128xf32>
    %31 = arith.maximumf %29, %30 : vector<128x128xf32>
    %32 = arith.truncf %31 : vector<128x128xf32> to vector<128x128xbf16>
    %c0_24 = arith.constant 0 : index
    %c0_25 = arith.constant 0 : index
    %33 = vector.load %arg10[%c0_24, %c0_25] : memref<4x128xbf16, #tpu.memory_space<vmem>>, vector<4x128xbf16>
    %cst_26 = arith.constant dense<0.000000e+00> : vector<4x128xf32>
    %34 = tpu.matmul %33, %32, %cst_26 {dimension_numbers = #tpu.dot_dimension_numbers<[1], [0], [0], [1], [0, 0, 1, 1], [], []>} : vector<4x128xbf16>, vector<128x128xbf16>, vector<4x128xf32> -> vector<4x128xf32>
    %c0_27 = arith.constant 0 : index
    %c0_28 = arith.constant 0 : index
    %35 = vector.load %arg11[%c0_27, %c0_28] : memref<4x1xf32, #tpu.memory_space<vmem>>, vector<4x1xf32>
    %36 = vector.broadcast %35 : vector<4x1xf32> to vector<4x128xf32>
    %37 = arith.addf %34, %36 : vector<4x128xf32>
    %c0_29 = arith.constant 0 : index
    %c0_30 = arith.constant 0 : index
    %38 = vector.load %arg12[%c0_29, %c0_30] : memref<4x128xf32, #tpu.memory_space<vmem>>, vector<4x128xf32>
    tpu.vector_store %arg12[%c0_29, %c0_30], %37 {strides = array<i32>} : memref<4x128xf32, #tpu.memory_space<vmem>>, vector<4x128xf32>,
    return
  }
  func.func @transform_0(%arg0: i32) -> (i32, i32) {
    %c0_i32 = arith.constant 0 : i32
    %c0_i32_0 = arith.constant 0 : i32
    return %arg0, %c0_i32 : i32, i32
  }
  func.func @transform_1(%arg0: i32) -> (i32, i32) {
    %c0_i32 = arith.constant 0 : i32
    %c0_i32_0 = arith.constant 0 : i32
    %c0_i32_1 = arith.constant 0 : i32
    return %c0_i32, %c0_i32_0 : i32, i32
  }
  func.func @transform_2(%arg0: i32) -> (i32, i32) {
    %c0_i32 = arith.constant 0 : i32
    %c0_i32_0 = arith.constant 0 : i32
    %c0_i32_1 = arith.constant 0 : i32
    return %c0_i32, %c0_i32_0 : i32, i32
  }
  func.func @transform_3(%arg0: i32) -> (i32, i32) {
    %c0_i32 = arith.constant 0 : i32
    %c0_i32_0 = arith.constant 0 : i32
    %c0_i32_1 = arith.constant 0 : i32
    return %c0_i32, %c0_i32_0 : i32, i32
  }
  func.func @transform_4(%arg0: i32) -> (i32, i32) {
    %c0_i32 = arith.constant 0 : i32
    %c0_i32_0 = arith.constant 0 : i32
    %c0_i32_1 = arith.constant 0 : i32
    return %c0_i32, %c0_i32_0 : i32, i32
  }
  func.func @transform_5(%arg0: i32) -> (i32, i32) {
    %c0_i32 = arith.constant 0 : i32
    %c0_i32_0 = arith.constant 0 : i32
    %c0_i32_1 = arith.constant 0 : i32
    return %c0_i32, %c0_i32_0 : i32, i32
  }
  func.func @transform_6(%arg0: i32) -> (i32, i32) {
    %c0_i32 = arith.constant 0 : i32
    %c0_i32_0 = arith.constant 0 : i32
    %c0_i32_1 = arith.constant 0 : i32
    return %c0_i32, %c0_i32_0 : i32, i32
  }
  func.func @transform_7(%arg0: i32) -> (i32, i32) {
    %c0_i32 = arith.constant 0 : i32
    %c0_i32_0 = arith.constant 0 : i32
    %c0_i32_1 = arith.constant 0 : i32
    return %c0_i32, %c0_i32_0 : i32, i32
  }
  func.func @transform_8(%arg0: i32) -> (i32, i32) {
    %c0_i32 = arith.constant 0 : i32
    %c0_i32_0 = arith.constant 0 : i32
    %c0_i32_1 = arith.constant 0 : i32
    return %c0_i32, %c0_i32_0 : i32, i32
  }
  func.func @transform_9(%arg0: i32) -> (i32, i32) {
    %c0_i32 = arith.constant 0 : i32
    %c0_i32_0 = arith.constant 0 : i32
    %c0_i32_1 = arith.constant 0 : i32
    return %c0_i32, %c0_i32_0 : i32, i32
  }
  func.func @transform_10(%arg0: i32) -> (i32, i32) {
    %c0_i32 = arith.constant 0 : i32
    %c0_i32_0 = arith.constant 0 : i32
    %c0_i32_1 = arith.constant 0 : i32
    return %c0_i32, %c0_i32_0 : i32, i32
  }
  func.func @transform_11(%arg0: i32) -> (i32, i32) {
    %c0_i32 = arith.constant 0 : i32
    %c0_i32_0 = arith.constant 0 : i32
    return %c0_i32, %arg0 : i32, i32
  }
}

</mosaic_0001>

<llo_original>
// kernel: tpu_custom_call.1
$region0: #{tpu_custom_call.1}
  #allocation0 [shape = 'u32[]', space=smem, size = 0x4, offset = 0x4, fixed_abs, tag = 'smem constant byte address 0x4 - core index']
  #allocation1 [shape = 'u32[72,128]{1,0:T(1,128)}', space=vmem, size = 0x9000, scoped, tag = 'internal scratch']
  %s0 = inlined_call_operand.vmem [shape: f32[128,8], index: 0, kind: input, shape index: {}]
  %s1 = inlined_call_operand.vmem [shape: f32[16,8], index: 1, kind: input, shape index: {}]
  %s2 = inlined_call_operand.vmem [shape: f32[16,1], index: 2, kind: input, shape index: {}]
  %s3 = inlined_call_operand.vmem [shape: bf16[32,16], index: 3, kind: input, shape index: {}]
  %s4 = inlined_call_operand.vmem [shape: f32[32,1], index: 4, kind: input, shape index: {}]
  %s5 = inlined_call_operand.vmem [shape: bf16[64,32], index: 5, kind: input, shape index: {}]
  %s6 = inlined_call_operand.vmem [shape: f32[64,1], index: 6, kind: input, shape index: {}]
  %s7 = inlined_call_operand.vmem [shape: bf16[128,64], index: 7, kind: input, shape index: {}]
  %s8 = inlined_call_operand.vmem [shape: f32[128,1], index: 8, kind: input, shape index: {}]
  %s9 = inlined_call_operand.vmem [shape: bf16[4,128], index: 9, kind: input, shape index: {}]
  %s10 = inlined_call_operand.vmem [shape: f32[4,1], index: 10, kind: input, shape index: {}]
  %s11 = inlined_call_operand.hbm [shape: f32[4,128], index: 11, kind: output, shape index: {}]
  %s12 = sld [smem:[#allocation0]]
  $region54: #{tpu_custom_call.1} parent=0
    _
  %s14 = ssub.s32 1, %s12
  %s15 = scalar_select 0, %s14, %s12
  $region1: #{tpu_custom_call.1} parent=0
    #allocation2 [shape = 'u8[2048]{0}', space=vmem, size = 0x800, scoped, tag = 'output window, operand 0, single buffered']
    #allocation3 [shape = 's32[1]{0}', space=sflag, size = 0x4, scoped, tag = 'scoped memory for tpu_custom_call.1']
    %16 = vsyncpa [#allocation3], 0
    // Predicated region
    $region2: #{tpu_custom_call.1} parent=1 // pred_check
      _
    $region3: #{tpu_custom_call.1} parent=1 // pred_check_branch
      %18 = sbr.rel (0) target = $region5
    $region4: #{tpu_custom_call.1} parent=1 // pred_region
      _
    $region5: #{tpu_custom_call.1} parent=1 // pred_fallthru
      _
    // Predicated region
    $region6: #{tpu_custom_call.1} parent=1 // pred_check
      _
    $region7: #{tpu_custom_call.1} parent=1 // pred_check_branch
      %20 = sbr.rel (0) target = $region9
    $region8: #{tpu_custom_call.1} parent=1 // pred_region
      _
    $region9: #{tpu_custom_call.1} parent=1 // pred_fallthru
      _
    // Predicated region
    $region10: #{tpu_custom_call.1} parent=1 // pred_check
      _
    $region11: #{tpu_custom_call.1} parent=1 // pred_check_branch
      %22 = sbr.rel (0) target = $region13
    $region12: #{tpu_custom_call.1} parent=1 // pred_region
      _
    $region13: #{tpu_custom_call.1} parent=1 // pred_fallthru
      _
    // Predicated region
    $region14: #{tpu_custom_call.1} parent=1 // pred_check
      _
    $region15: #{tpu_custom_call.1} parent=1 // pred_check_branch
      %24 = sbr.rel (0) target = $region17
    $region16: #{tpu_custom_call.1} parent=1 // pred_region
      _
    $region17: #{tpu_custom_call.1} parent=1 // pred_fallthru
      _
    // Predicated region
    $region18: #{tpu_custom_call.1} parent=1 // pred_check
      _
    $region19: #{tpu_custom_call.1} parent=1 // pred_check_branch
      %26 = sbr.rel (0) target = $region21
    $region20: #{tpu_custom_call.1} parent=1 // pred_region
      _
    $region21: #{tpu_custom_call.1} parent=1 // pred_fallthru
      _
    // Predicated region
    $region22: #{tpu_custom_call.1} parent=1 // pred_check
      _
    $region23: #{tpu_custom_call.1} parent=1 // pred_check_branch
      %28 = sbr.rel (0) target = $region25
    $region24: #{tpu_custom_call.1} parent=1 // pred_region
      _
    $region25: #{tpu_custom_call.1} parent=1 // pred_fallthru
      _
    // Predicated region
    $region26: #{tpu_custom_call.1} parent=1 // pred_check
      _
    $region27: #{tpu_custom_call.1} parent=1 // pred_check_branch
      %30 = sbr.rel (0) target = $region29
    $region28: #{tpu_custom_call.1} parent=1 // pred_region
      _
    $region29: #{tpu_custom_call.1} parent=1 // pred_fallthru
      _
    // Predicated region
    $region30: #{tpu_custom_call.1} parent=1 // pred_check
      _
    $region31: #{tpu_custom_call.1} parent=1 // pred_check_branch
      %32 = sbr.rel (0) target = $region33
    $region32: #{tpu_custom_call.1} parent=1 // pred_region
      _
    $region33: #{tpu_custom_call.1} parent=1 // pred_fallthru
      _
    // Predicated region
    $region34: #{tpu_custom_call.1} parent=1 // pred_check
      _
    $region35: #{tpu_custom_call.1} parent=1 // pred_check_branch
      %34 = sbr.rel (0) target = $region37
    $region36: #{tpu_custom_call.1} parent=1 // pred_region
      _
    $region37: #{tpu_custom_call.1} parent=1 // pred_fallthru
      _
    // Predicated region
    $region38: #{tpu_custom_call.1} parent=1 // pred_check
      _
    $region39: #{tpu_custom_call.1} parent=1 // pred_check_branch
      %36 = sbr.rel (0) target = $region41
    $region40: #{tpu_custom_call.1} parent=1 // pred_region
      _
    $region41: #{tpu_custom_call.1} parent=1 // pred_fallthru
      _
    // Predicated region
    $region42: #{tpu_custom_call.1} parent=1 // pred_check
      _
    $region43: #{tpu_custom_call.1} parent=1 // pred_check_branch
      %38 = sbr.rel (0) target = $region45
    $region44: #{tpu_custom_call.1} parent=1 // pred_region
      _
    $region45: #{tpu_custom_call.1} parent=1 // pred_fallthru
      _
    %v40 = vld [vmem:[%s0] sm:$0xff]
    %v41 = vld [vmem:[%s0 + $0x8] sm:$0xff]
    %v42 = vld [vmem:[%s0 + $0x10] sm:$0xff]
    %v43 = vld [vmem:[%s0 + $0x18] sm:$0xff]
    %v44 = vld [vmem:[%s0 + $0x20] sm:$0xff]
    %v45 = vld [vmem:[%s0 + $0x28] sm:$0xff]
    %v46 = vld [vmem:[%s0 + $0x30] sm:$0xff]
    %v47 = vld [vmem:[%s0 + $0x38] sm:$0xff]
    %v48 = vld [vmem:[%s0 + $0x40] sm:$0xff]
    %v49 = vld [vmem:[%s0 + $0x48] sm:$0xff]
    %v50 = vld [vmem:[%s0 + $0x50] sm:$0xff]
    %v51 = vld [vmem:[%s0 + $0x58] sm:$0xff]
    %v52 = vld [vmem:[%s0 + $0x60] sm:$0xff]
    %v53 = vld [vmem:[%s0 + $0x68] sm:$0xff]
    %v54 = vld [vmem:[%s0 + $0x70] sm:$0xff]
    %v55 = vld [vmem:[%s0 + $0x78] sm:$0xff]
    %v56 = vld [vmem:[%s1] sm:$0xff]
    %v57 = vld [vmem:[%s1 + $0x8] sm:$0xff]
    %v58 = vld [vmem:[%s2] sm:$0xff]
    %v59 = vld [vmem:[%s2 + $0x8] sm:$0xff]
    %61 = vset.pattern.permute.xlu0 0
    %62 = vperm.xlu0 %61, %v58
    %v63 = vpop.permute.xlu0 %62
    %66 = vset.pattern.permute.xlu0 0
    %67 = vperm.xlu0 %66, %v59
    %v68 = vpop.permute.xlu0 %67
    %vm70 = vcmask 64512
    %v72 = vsel %vm70, %v56, 0
    %v75 = vsel %vm70, %v57, 0
    %v78 = vsel %vm70, %v40, 0
    %v81 = vsel %vm70, %v41, 0
    %v84 = vsel %vm70, %v42, 0
    %v87 = vsel %vm70, %v43, 0
    %v90 = vsel %vm70, %v44, 0
    %v93 = vsel %vm70, %v45, 0
    %v96 = vsel %vm70, %v46, 0
    %v99 = vsel %vm70, %v47, 0
    %v102 = vsel %vm70, %v48, 0
    %v105 = vsel %vm70, %v49, 0
    %v108 = vsel %vm70, %v50, 0
    %v111 = vsel %vm70, %v51, 0
    %v114 = vsel %vm70, %v52, 0
    %v117 = vsel %vm70, %v53, 0
    %v120 = vsel %vm70, %v54, 0
    %v123 = vsel %vm70, %v55, 0
    %125 = vmatpush.xpose.msra.mxu0 %v123
    %126 = vmatpush.xpose.msra.mxu0 %v120
    %127 = vmatpush.xpose.msra.mxu0 %v117
    %128 = vmatpush.xpose.msra.mxu0 %v114
    %129 = vmatpush.xpose.msra.mxu0 %v111
    %130 = vmatpush.xpose.msra.mxu0 %v108
    %131 = vmatpush.xpose.msra.mxu0 %v105
    %132 = vmatpush.xpose.msra.mxu0 %v102
    %133 = vmatpush.xpose.msra.mxu0 %v99
    %134 = vmatpush.xpose.msra.mxu0 %v96
    %135 = vmatpush.xpose.msra.mxu0 %v93
    %136 = vmatpush.xpose.msra.mxu0 %v90
    %137 = vmatpush.xpose.msra.mxu0 %v87
    %138 = vmatpush.xpose.msra.mxu0 %v84
    %139 = vmatpush.xpose.msra.mxu0 %v81
    %140 = vmatpush.xpose.msra.mxu0 %v78
    %141 = vmatmul.f32.gmra.mxu0 %v72
    %v142 = vpop.f32.mrf.mxu0
    %v143 = vadd.f32 %v63, %v142
    %144 = vmatmul.f32.gmra.mxu0 %v75
    %v145 = vpop.f32.mrf.mxu0
    %v146 = vadd.f32 %v68, %v145
    %147 = vdwg.mxu0
    %v148 = vmax.f32 %v143, 0.0
    %v149 = vmax.f32 %v146, 0.0
    %v150 = vpack.c.bf16 %v149, %v148
    %v151 = vld [vmem:[%s3] sm:$0xf]
    %v152 = vld [vmem:[%s3 + $0x4] sm:$0xf]
    %v153 = vld [vmem:[%s3 + $0x8] sm:$0xf]
    %v154 = vld [vmem:[%s3 + $0xc] sm:$0xf]
    %v155 = vld [vmem:[%s4] sm:$0xff]
    %v156 = vld [vmem:[%s4 + $0x8] sm:$0xff]
    %v157 = vld [vmem:[%s4 + $0x10] sm:$0xff]
    %v158 = vld [vmem:[%s4 + $0x18] sm:$0xff]
    %160 = vset.pattern.permute.xlu0 0
    %161 = vperm.xlu0 %160, %v155
    %v162 = vpop.permute.xlu0 %161
    %165 = vset.pattern.permute.xlu0 0
    %166 = vperm.xlu0 %165, %v156
    %v167 = vpop.permute.xlu0 %166
    %170 = vset.pattern.permute.xlu0 0
    %171 = vperm.xlu0 %170, %v157
    %v172 = vpop.permute.xlu0 %171
    %175 = vset.pattern.permute.xlu0 0
    %176 = vperm.xlu0 %175, %v158
    %v177 = vpop.permute.xlu0 %176
    %v183 = vunpack.c.l.b16 %v151
    %v184 = vunpack.c.l.b16 %v152
    %v185 = vunpack.c.l.b16 %v153
    %v186 = vunpack.c.l.b16 %v154
    %v187 = vpack.c.b16 %v184, %v183
    %v188 = vpack.c.b16 %v186, %v185
    %vm189 = vcmask 130048
    %v191 = vsel %vm189, %v187, 0
    %v194 = vsel %vm189, %v188, 0
    %196 = vmatpush.bf16.msra.mxu0 0
    %197 = vmatpush.bf16.msra.mxu0 0
    %198 = vmatpush.bf16.msra.mxu0 0
    %199 = vmatpush.bf16.msra.mxu0 0
    %200 = vmatpush.bf16.msra.mxu0 0
    %201 = vmatpush.bf16.msra.mxu0 0
    %202 = vmatpush.bf16.msra.mxu0 0
    %203 = vmatpush.bf16.msra.mxu0 %v150
    %204 = vmatmul.bf16.gmra.mxu0 %v191
    %v205 = vpop.f32.mrf.mxu0
    %v206 = vadd.f32 %v162, %v205
    %v207 = vpop.f32.mrf.mxu0
    %v208 = vadd.f32 %v167, %v207
    %209 = vmatmul.bf16.gmra.mxu0 %v194
    %v210 = vpop.f32.mrf.mxu0
    %v211 = vadd.f32 %v172, %v210
    %v212 = vpop.f32.mrf.mxu0
    %v213 = vadd.f32 %v177, %v212
    %214 = vdwg.mxu0
    %v215 = vmax.f32 %v206, 0.0
    %v216 = vmax.f32 %v208, 0.0
    %v217 = vmax.f32 %v211, 0.0
    %v218 = vmax.f32 %v213, 0.0
    %v219 = vpack.c.bf16 %v216, %v215
    %v220 = vpack.c.bf16 %v218, %v217
    %v221 = vld [vmem:[%s5] sm:$0xf]
    %v222 = vld [vmem:[%s5 + $0x4] sm:$0xf]
    %v223 = vld [vmem:[%s5 + $0x8] sm:$0xf]
    %v224 = vld [vmem:[%s5 + $0xc] sm:$0xf]
    %v225 = vld [vmem:[%s5 + $0x10] sm:$0xf]
    %v226 = vld [vmem:[%s5 + $0x14] sm:$0xf]
    %v227 = vld [vmem:[%s5 + $0x18] sm:$0xf]
    %v228 = vld [vmem:[%s5 + $0x1c] sm:$0xf]
    %v229 = vld [vmem:[%s6] sm:$0xff]
    %v230 = vld [vmem:[%s6 + $0x8] sm:$0xff]
    %v231 = vld [vmem:[%s6 + $0x10] sm:$0xff]
    %v232 = vld [vmem:[%s6 + $0x18] sm:$0xff]
    %v233 = vld [vmem:[%s6 + $0x20] sm:$0xff]
    %v234 = vld [vmem:[%s6 + $0x28] sm:$0xff]
    %v235 = vld [vmem:[%s6 + $0x30] sm:$0xff]
    %v236 = vld [vmem:[%s6 + $0x38] sm:$0xff]
    %238 = vset.pattern.permute.xlu0 0
    %239 = vperm.xlu0 %238, %v229
    %v240 = vpop.permute.xlu0 %239
    %243 = vset.pattern.permute.xlu0 0
    %244 = vperm.xlu0 %243, %v230
    %v245 = vpop.permute.xlu0 %244
    %248 = vset.pattern.permute.xlu0 0
    %249 = vperm.xlu0 %248, %v231
    %v250 = vpop.permute.xlu0 %249
    %253 = vset.pattern.permute.xlu0 0
    %254 = vperm.xlu0 %253, %v232
    %v255 = vpop.permute.xlu0 %254
    %258 = vset.pattern.permute.xlu0 0
    %259 = vperm.xlu0 %258, %v233
    %v260 = vpop.permute.xlu0 %259
    %263 = vset.pattern.permute.xlu0 0
    %264 = vperm.xlu0 %263, %v234
    %v265 = vpop.permute.xlu0 %264
    %268 = vset.pattern.permute.xlu0 0
    %269 = vperm.xlu0 %268, %v235
    %v270 = vpop.permute.xlu0 %269
    %273 = vset.pattern.permute.xlu0 0
    %274 = vperm.xlu0 %273, %v236
    %v275 = vpop.permute.xlu0 %274
    %v285 = vunpack.c.l.b16 %v221
    %v286 = vunpack.c.l.b16 %v222
    %v287 = vunpack.c.l.b16 %v223
    %v288 = vunpack.c.l.b16 %v224
    %v289 = vunpack.c.l.b16 %v225
    %v290 = vunpack.c.l.b16 %v226
    %v291 = vunpack.c.l.b16 %v227
    %v292 = vunpack.c.l.b16 %v228
    %v293 = vpack.c.b16 %v286, %v285
    %v294 = vpack.c.b16 %v288, %v287
    %v295 = vpack.c.b16 %v290, %v289
    %v296 = vpack.c.b16 %v292, %v291
    %vm297 = vcmask 261120
    %v299 = vsel %vm297, %v293, 0
    %v302 = vsel %vm297, %v294, 0
    %v305 = vsel %vm297, %v295, 0
    %v308 = vsel %vm297, %v296, 0
    %310 = vmatpush.bf16.msra.mxu0 0
    %311 = vmatpush.bf16.msra.mxu0 0
    %312 = vmatpush.bf16.msra.mxu0 0
    %313 = vmatpush.bf16.msra.mxu0 0
    %314 = vmatpush.bf16.msra.mxu0 0
    %315 = vmatpush.bf16.msra.mxu0 0
    %316 = vmatpush.bf16.msra.mxu0 %v220
    %317 = vmatpush.bf16.msra.mxu0 %v219
    %318 = vmatmul.bf16.gmra.mxu0 %v299
    %v319 = vpop.f32.mrf.mxu0
    %v320 = vadd.f32 %v240, %v319
    %v321 = vpop.f32.mrf.mxu0
    %v322 = vadd.f32 %v245, %v321
    %323 = vmatmul.bf16.gmra.mxu0 %v302
    %v324 = vpop.f32.mrf.mxu0
    %v325 = vadd.f32 %v250, %v324
    %v326 = vpop.f32.mrf.mxu0
    %v327 = vadd.f32 %v255, %v326
    %328 = vmatmul.bf16.gmra.mxu0 %v305
    %v329 = vpop.f32.mrf.mxu0
    %v330 = vadd.f32 %v260, %v329
    %v331 = vpop.f32.mrf.mxu0
    %v332 = vadd.f32 %v265, %v331
    %333 = vmatmul.bf16.gmra.mxu0 %v308
    %v334 = vpop.f32.mrf.mxu0
    %v335 = vadd.f32 %v270, %v334
    %v336 = vpop.f32.mrf.mxu0
    %v337 = vadd.f32 %v275, %v336
    %338 = vdwg.mxu0
    %v339 = vmax.f32 %v320, 0.0
    %v340 = vmax.f32 %v322, 0.0
    %v341 = vmax.f32 %v325, 0.0
    %v342 = vmax.f32 %v327, 0.0
    %v343 = vmax.f32 %v330, 0.0
    %v344 = vmax.f32 %v332, 0.0
    %v345 = vmax.f32 %v335, 0.0
    %v346 = vmax.f32 %v337, 0.0
    %v347 = vpack.c.bf16 %v340, %v339
    %v348 = vpack.c.bf16 %v342, %v341
    %v349 = vpack.c.bf16 %v344, %v343
    %v350 = vpack.c.bf16 %v346, %v345
    %v351 = vld [vmem:[%s7] sm:$0xf]
    %v352 = vld [vmem:[%s7 + $0x4] sm:$0xf]
    %v353 = vld [vmem:[%s7 + $0x8] sm:$0xf]
    %v354 = vld [vmem:[%s7 + $0xc] sm:$0xf]
    %v355 = vld [vmem:[%s7 + $0x10] sm:$0xf]
    %v356 = vld [vmem:[%s7 + $0x14] sm:$0xf]
    %v357 = vld [vmem:[%s7 + $0x18] sm:$0xf]
    %v358 = vld [vmem:[%s7 + $0x1c] sm:$0xf]
    %v359 = vld [vmem:[%s7 + $0x20] sm:$0xf]
    %v360 = vld [vmem:[%s7 + $0x24] sm:$0xf]
    %v361 = vld [vmem:[%s7 + $0x28] sm:$0xf]
    %v362 = vld [vmem:[%s7 + $0x2c] sm:$0xf]
    %v363 = vld [vmem:[%s7 + $0x30] sm:$0xf]
    %v364 = vld [vmem:[%s7 + $0x34] sm:$0xf]
    %v365 = vld [vmem:[%s7 + $0x38] sm:$0xf]
    %v366 = vld [vmem:[%s7 + $0x3c] sm:$0xf]
    %v367 = vld [vmem:[%s8] sm:$0xff]
    %v368 = vld [vmem:[%s8 + $0x8] sm:$0xff]
    %v369 = vld [vmem:[%s8 + $0x10] sm:$0xff]
    %v370 = vld [vmem:[%s8 + $0x18] sm:$0xff]
    %v371 = vld [vmem:[%s8 + $0x20] sm:$0xff]
    %v372 = vld [vmem:[%s8 + $0x28] sm:$0xff]
    %v373 = vld [vmem:[%s8 + $0x30] sm:$0xff]
    %v374 = vld [vmem:[%s8 + $0x38] sm:$0xff]
    %v375 = vld [vmem:[%s8 + $0x40] sm:$0xff]
    %v376 = vld [vmem:[%s8 + $0x48] sm:$0xff]
    %v377 = vld [vmem:[%s8 + $0x50] sm:$0xff]
    %v378 = vld [vmem:[%s8 + $0x58] sm:$0xff]
    %v379 = vld [vmem:[%s8 + $0x60] sm:$0xff]
    %v380 = vld [vmem:[%s8 + $0x68] sm:$0xff]
    %v381 = vld [vmem:[%s8 + $0x70] sm:$0xff]
    %v382 = vld [vmem:[%s8 + $0x78] sm:$0xff]
    %384 = vset.pattern.permute.xlu0 0
    %385 = vperm.xlu0 %384, %v367
    %v386 = vpop.permute.xlu0 %385
    %389 = vset.pattern.permute.xlu0 0
    %390 = vperm.xlu0 %389, %v368
    %v391 = vpop.permute.xlu0 %390
    %394 = vset.pattern.permute.xlu0 0
    %395 = vperm.xlu0 %394, %v369
    %v396 = vpop.permute.xlu0 %395
    %399 = vset.pattern.permute.xlu0 0
    %400 = vperm.xlu0 %399, %v370
    %v401 = vpop.permute.xlu0 %400
    %404 = vset.pattern.permute.xlu0 0
    %405 = vperm.xlu0 %404, %v371
    %v406 = vpop.permute.xlu0 %405
    %409 = vset.pattern.permute.xlu0 0
    %410 = vperm.xlu0 %409, %v372
    %v411 = vpop.permute.xlu0 %410
    %414 = vset.pattern.permute.xlu0 0
    %415 = vperm.xlu0 %414, %v373
    %v416 = vpop.permute.xlu0 %415
    %419 = vset.pattern.permute.xlu0 0
    %420 = vperm.xlu0 %419, %v374
    %v421 = vpop.permute.xlu0 %420
    %424 = vset.pattern.permute.xlu0 0
    %425 = vperm.xlu0 %424, %v375
    %v426 = vpop.permute.xlu0 %425
    %429 = vset.pattern.permute.xlu0 0
    %430 = vperm.xlu0 %429, %v376
    %v431 = vpop.permute.xlu0 %430
    %434 = vset.pattern.permute.xlu0 0
    %435 = vperm.xlu0 %434, %v377
    %v436 = vpop.permute.xlu0 %435
    %439 = vset.pattern.permute.xlu0 0
    %440 = vperm.xlu0 %439, %v378
    %v441 = vpop.permute.xlu0 %440
    %444 = vset.pattern.permute.xlu0 0
    %445 = vperm.xlu0 %444, %v379
    %v446 = vpop.permute.xlu0 %445
    %449 = vset.pattern.permute.xlu0 0
    %450 = vperm.xlu0 %449, %v380
    %v451 = vpop.permute.xlu0 %450
    %454 = vset.pattern.permute.xlu0 0
    %455 = vperm.xlu0 %454, %v381
    %v456 = vpop.permute.xlu0 %455
    %459 = vset.pattern.permute.xlu0 0
    %460 = vperm.xlu0 %459, %v382
    %v461 = vpop.permute.xlu0 %460
    %v479 = vunpack.c.l.b16 %v351
    %v480 = vunpack.c.l.b16 %v352
    %v481 = vunpack.c.l.b16 %v353
    %v482 = vunpack.c.l.b16 %v354
    %v483 = vunpack.c.l.b16 %v355
    %v484 = vunpack.c.l.b16 %v356
    %v485 = vunpack.c.l.b16 %v357
    %v486 = vunpack.c.l.b16 %v358
    %v487 = vunpack.c.l.b16 %v359
    %v488 = vunpack.c.l.b16 %v360
    %v489 = vunpack.c.l.b16 %v361
    %v490 = vunpack.c.l.b16 %v362
    %v491 = vunpack.c.l.b16 %v363
    %v492 = vunpack.c.l.b16 %v364
    %v493 = vunpack.c.l.b16 %v365
    %v494 = vunpack.c.l.b16 %v366
    %v495 = vpack.c.b16 %v480, %v479
    %v496 = vpack.c.b16 %v482, %v481
    %v497 = vpack.c.b16 %v484, %v483
    %v498 = vpack.c.b16 %v486, %v485
    %v499 = vpack.c.b16 %v488, %v487
    %v500 = vpack.c.b16 %v490, %v489
    %v501 = vpack.c.b16 %v492, %v491
    %v502 = vpack.c.b16 %v494, %v493
    %vm503 = vcmask 523264
    %v505 = vsel %vm503, %v495, 0
    %v508 = vsel %vm503, %v496, 0
    %v511 = vsel %vm503, %v497, 0
    %v514 = vsel %vm503, %v498, 0
    %v517 = vsel %vm503, %v499, 0
    %v520 = vsel %vm503, %v500, 0
    %v523 = vsel %vm503, %v501, 0
    %v526 = vsel %vm503, %v502, 0
    %528 = vmatpush.bf16.msra.mxu0 0
    %529 = vmatpush.bf16.msra.mxu0 0
    %530 = vmatpush.bf16.msra.mxu0 0
    %531 = vmatpush.bf16.msra.mxu0 0
    %532 = vmatpush.bf16.msra.mxu0 %v350
    %533 = vmatpush.bf16.msra.mxu0 %v349
    %534 = vmatpush.bf16.msra.mxu0 %v348
    %535 = vmatpush.bf16.msra.mxu0 %v347
    %536 = vmatmul.bf16.gmra.mxu0 %v505
    %v537 = vpop.f32.mrf.mxu0
    %v538 = vadd.f32 %v386, %v537
    %v539 = vpop.f32.mrf.mxu0
    %v540 = vadd.f32 %v391, %v539
    %541 = vmatmul.bf16.gmra.mxu0 %v508
    %v542 = vpop.f32.mrf.mxu0
    %v543 = vadd.f32 %v396, %v542
    %v544 = vpop.f32.mrf.mxu0
    %v545 = vadd.f32 %v401, %v544
    %546 = vmatmul.bf16.gmra.mxu0 %v511
    %v547 = vpop.f32.mrf.mxu0
    %v548 = vadd.f32 %v406, %v547
    %v549 = vpop.f32.mrf.mxu0
    %v550 = vadd.f32 %v411, %v549
    %551 = vmatmul.bf16.gmra.mxu0 %v514
    %v552 = vpop.f32.mrf.mxu0
    %v553 = vadd.f32 %v416, %v552
    %v554 = vpop.f32.mrf.mxu0
    %v555 = vadd.f32 %v421, %v554
    %556 = vmatmul.bf16.gmra.mxu0 %v517
    %v557 = vpop.f32.mrf.mxu0
    %v558 = vadd.f32 %v426, %v557
    %v559 = vpop.f32.mrf.mxu0
    %v560 = vadd.f32 %v431, %v559
    %561 = vmatmul.bf16.gmra.mxu0 %v520
    %v562 = vpop.f32.mrf.mxu0
    %v563 = vadd.f32 %v436, %v562
    %v564 = vpop.f32.mrf.mxu0
    %v565 = vadd.f32 %v441, %v564
    %566 = vmatmul.bf16.gmra.mxu0 %v523
    %v567 = vpop.f32.mrf.mxu0
    %v568 = vadd.f32 %v446, %v567
    %v569 = vpop.f32.mrf.mxu0
    %v570 = vadd.f32 %v451, %v569
    %571 = vmatmul.bf16.gmra.mxu0 %v526
    %v572 = vpop.f32.mrf.mxu0
    %v573 = vadd.f32 %v456, %v572
    %v574 = vpop.f32.mrf.mxu0
    %v575 = vadd.f32 %v461, %v574
    %576 = vdwg.mxu0
    %v577 = vmax.f32 %v538, 0.0
    %v578 = vmax.f32 %v540, 0.0
    %v579 = vmax.f32 %v543, 0.0
    %v580 = vmax.f32 %v545, 0.0
    %v581 = vmax.f32 %v548, 0.0
    %v582 = vmax.f32 %v550, 0.0
    %v583 = vmax.f32 %v553, 0.0
    %v584 = vmax.f32 %v555, 0.0
    %v585 = vmax.f32 %v558, 0.0
    %v586 = vmax.f32 %v560, 0.0
    %v587 = vmax.f32 %v563, 0.0
    %v588 = vmax.f32 %v565, 0.0
    %v589 = vmax.f32 %v568, 0.0
    %v590 = vmax.f32 %v570, 0.0
    %v591 = vmax.f32 %v573, 0.0
    %v592 = vmax.f32 %v575, 0.0
    %v593 = vpack.c.bf16 %v578, %v577
    %v594 = vpack.c.bf16 %v580, %v579
    %v595 = vpack.c.bf16 %v582, %v581
    %v596 = vpack.c.bf16 %v584, %v583
    %v597 = vpack.c.bf16 %v586, %v585
    %v598 = vpack.c.bf16 %v588, %v587
    %v599 = vpack.c.bf16 %v590, %v589
    %v600 = vpack.c.bf16 %v592, %v591
    %v601 = vld [vmem:[%s9] sm:$0x3]
    %v602 = vld [vmem:[%s10] sm:$0xf]
    %604 = vset.pattern.permute.xlu0 0
    %605 = vperm.xlu0 %604, %v602
    %v606 = vpop.permute.xlu0 %605
    %608 = vmatpush.bf16.msra.mxu0 %v600
    %609 = vmatpush.bf16.msra.mxu0 %v599
    %610 = vmatpush.bf16.msra.mxu0 %v598
    %611 = vmatpush.bf16.msra.mxu0 %v597
    %612 = vmatpush.bf16.msra.mxu0 %v596
    %613 = vmatpush.bf16.msra.mxu0 %v595
    %614 = vmatpush.bf16.msra.mxu0 %v594
    %615 = vmatpush.bf16.msra.mxu0 %v593
    %616 = vmatmul.bf16.gmra.mxu0 %v601
    %v617 = vpop.f32.mrf.mxu0
    %v618 = vadd.f32 %v606, %v617
    %v619 = vpop.f32.mrf.mxu0
    %620 = vdwg.mxu0
    %621 = vst [vmem:[#allocation2] sm:$0xf] %v618
    // Predicated region
    $region46: #{tpu_custom_call.1} parent=1 // pred_check
      _
    $region47: #{tpu_custom_call.1} parent=1 // pred_check_branch
      %623 = sbr.rel (0) target = $region49
    $region48: #{tpu_custom_call.1} parent=1 // pred_region
      %625 = vsyncadd [#allocation3], 0
      %s627 = sshll.u32 [#allocation2], 4
      %s628 = int_to_ptr.vmem [resolvable:$true] %s627
      %s629 = sshll.u32 %s11, 4
      %s630 = int_to_ptr.hbm [resolvable:$true] %s629
      %632 = dma.vmem_to_hbm [thread:$0]  %s628, 64, %s630, [#allocation3]
    $region49: #{tpu_custom_call.1} parent=1 // pred_fallthru
      _
    // Predicated region
    $region50: #{tpu_custom_call.1} parent=1 // pred_check
      _
    $region51: #{tpu_custom_call.1} parent=1 // pred_check_branch
      %634 = sbr.rel (0) target = $region53
    $region52: #{tpu_custom_call.1} parent=1 // pred_region
      %636 = dma.done [#allocation3], 64
    $region53: #{tpu_custom_call.1} parent=1 // pred_fallthru
      _
    %637 = vsyncpa [#allocation3], 1

</llo_original>
